<compile_context>
chip_gen: v6e
topology: v6e:2x2x1
jax: 0.10.0
libtpu: 0.0.40
codegen_flags: <defaults>
</compile_context>

<pallas_src>
import functools

import jax
import jax.numpy as jnp
from jax.experimental import pallas as pl
from jax.experimental.pallas import tpu as pltpu


def _round_up(n, m):
    return ((n + m - 1) // m) * m


def _pad_to(a, shape):
    if tuple(a.shape) == tuple(shape):
        return a
    widths = [(0, t - s) for s, t in zip(a.shape, shape)]
    return jnp.pad(a, widths)


def _chip_profile():
    """Coarse per-generation tuning knobs (VMEM headroom, lane alignment, bf16 VPU)."""
    kind = ""
    try:
        kind = jax.devices()[0].device_kind.lower()
    except Exception:
        pass  # no device info -> conservative defaults below
    if "v7" in kind:
        # 64 MiB VMEM per TC -> leave headroom; 2x256^2 MXU -> 256-aligned N/K; bf16 VPU.
        return dict(vmem_cap=48 << 20, align=256, bf16_vpu=True, tile_b_cap=512)
    if "v6" in kind:
        return dict(vmem_cap=96 << 20, align=256, bf16_vpu=True, tile_b_cap=1024)
    if "v5" in kind or "v4" in kind or "v3" in kind or "v2" in kind:
        # v5e and older: 4x128^2 MXU, no bf16 VPU path -> keep the f32 epilogue.
        return dict(vmem_cap=96 << 20, align=128, bf16_vpu=False, tile_b_cap=1024)
    return dict(vmem_cap=48 << 20, align=128, bf16_vpu=False, tile_b_cap=512)


def _mlp_kernel(x_ref, w1_ref, b1_ref, w2_ref, b2_ref, o_ref, acc_ref,
                *, compute_dtype, epilogue_dtype):
    k = pl.program_id(2)

    @pl.when(k == 0)
    def _init():
        acc_ref[...] = jnp.zeros_like(acc_ref)

    # First matmul on the MXU: cast x to the compute dtype in-kernel (the f32->bf16
    # cast rides the VPU instead of costing a full HBM round trip in the wrapper).
    x = x_ref[...].astype(compute_dtype)
    h = jnp.dot(x, w1_ref[...], preferred_element_type=jnp.float32)
    # Bias + ReLU epilogue (bf16 on v6e/v7x where the VPU has a bf16 path, f32 on v5e).
    h = jnp.maximum(h.astype(epilogue_dtype) + b1_ref[...],
                    jnp.zeros((), epilogue_dtype))
    # Second matmul: accumulate this hidden chunk's partial product in f32.
    acc_ref[...] += jnp.dot(h.astype(compute_dtype), w2_ref[...],
                            preferred_element_type=jnp.float32)

    @pl.when(k == pl.num_programs(2) - 1)
    def _finish():
        o_ref[...] = (acc_ref[...] + b2_ref[...]).astype(o_ref.dtype)


def mlp_pallas(x, w1, b1, w2, b2, *, tile_b=None, tile_h=None,
               compute_dtype=jnp.bfloat16, out_dtype=None):
    """y = relu(x @ w1 + b1) @ w2 + b2.   x:(B,D) w1:(D,H) b1:(1,H) w2:(H,P) b2:(1,P)."""
    B, D = x.shape
    H = w1.shape[1]
    P = w2.shape[1]
    out_dtype = x.dtype if out_dtype is None else out_dtype

    prof = _chip_profile()
    cb = jnp.dtype(compute_dtype).itemsize
    epilogue_dtype = compute_dtype if prof["bf16_vpu"] else jnp.float32

    # ---- tile sizes -------------------------------------------------------
    # Hidden axis: streamed in chunks (reduction axis of the second matmul) so
    # W1/W2 never have to be fully VMEM resident at realistic sizes.
    if tile_h is None:
        tile_h = min(512, _round_up(H, prof["align"]))
    else:
        tile_h = max(128, _round_up(tile_h, 128))
    Hp = _round_up(H, tile_h)

    # Output columns: lane-dense (>=128) and tiled, giving a second "parallel" grid
    # axis so both v7x TensorCores get work even when the batch grid is short.
    Pp = 128 if P <= 128 else _round_up(P, prof["align"])
    tile_p = next(c for c in (512, 256, 128) if Pp % c == 0)

    # Batch: largest sublane-aligned tile under the per-chip cap, shrunk if the
    # VMEM estimate would blow the per-chip budget.
    x_b = jnp.dtype(x.dtype).itemsize
    o_b = jnp.dtype(out_dtype).itemsize
    e_b = jnp.dtype(epilogue_dtype).itemsize
    sublane = 8
    if tile_b is None:
        tile_b = min(prof["tile_b_cap"], _round_up(B, sublane))
    else:
        tile_b = max(sublane, _round_up(tile_b, sublane))

    def vmem_est(tb):
        return (2 * tb * D * x_b                      # x tile (double-buffered)
                + 2 * D * tile_h * cb                 # W1 chunk
                + 2 * tile_h * e_b                    # b1 chunk
                + 2 * tile_h * tile_p * cb            # W2 chunk
                + 2 * tile_p * 4                      # b2 tile
                + 2 * tb * tile_p * o_b               # out tile
                + tb * tile_p * 4                     # f32 accumulator scratch
                + tb * tile_h * (4 + cb))             # live h intermediate

    while vmem_est(tile_b) > (prof["vmem_cap"] * 3) // 4 and tile_b > sublane:
        tile_b = max(sublane, _round_up(tile_b // 2, sublane))
    vmem_limit = int(min(prof["vmem_cap"], max(32 << 20, 2 * vmem_est(tile_b))))

    grid = (pl.cdiv(B, tile_b), Pp // tile_p, Hp // tile_h)

    # ---- operands (x itself is NOT copied, padded or cast in the wrapper) ----
    w1_c = _pad_to(w1, (D, Hp)).astype(compute_dtype)
    b1_c = _pad_to(b1, (1, Hp)).astype(epilogue_dtype)
    w2_c = _pad_to(w2, (Hp, Pp)).astype(compute_dtype)
    b2_c = _pad_to(b2, (1, Pp)).astype(jnp.float32)

    cost = pl.CostEstimate(
        flops=2 * B * D * H + 2 * B * H * P,
        transcendentals=0,
        bytes_accessed=int(B * D * x_b + D * H * cb + H * P * cb
                           + H * e_b + P * 4 + B * P * o_b),
    )

    kernel = functools.partial(_mlp_kernel,
                               compute_dtype=compute_dtype,
                               epilogue_dtype=epilogue_dtype)

    out = pl.pallas_call(
        kernel,
        out_shape=jax.ShapeDtypeStruct((B, Pp), out_dtype),
        grid_spec=pltpu.PrefetchScalarGridSpec(
            num_scalar_prefetch=0,
            grid=grid,
            in_specs=[
                pl.BlockSpec((tile_b, D), lambda i, j, k: (i, 0)),       # x batch tile
                pl.BlockSpec((D, tile_h), lambda i, j, k: (0, k)),       # W1 H-chunk
                pl.BlockSpec((1, tile_h), lambda i, j, k: (0, k)),       # b1 H-chunk
                pl.BlockSpec((tile_h, tile_p), lambda i, j, k: (k, j)),  # W2 chunk
                pl.BlockSpec((1, tile_p), lambda i, j, k: (0, j)),       # b2 col tile
            ],
            out_specs=pl.BlockSpec((tile_b, tile_p), lambda i, j, k: (i, j)),
            scratch_shapes=[pltpu.VMEM((tile_b, tile_p), jnp.float32)],
        ),
        compiler_params=pltpu.CompilerParams(
            dimension_semantics=("parallel", "parallel", "arbitrary"),
            vmem_limit_bytes=vmem_limit,
        ),
        cost_estimate=cost,
    )(x, w1_c, b1_c, w2_c, b2_c)

    # Only pad/slice columns, and only when P is not already lane-dense.
    return out if Pp == P else out[:, :P]


def init_mlp_params(key, dim, projection_size, hidden_size=256, dtype=jnp.float32):
    """Deterministic init matching nn.Linear shapes (weights stored transposed)."""
    k1, k2, k3, k4 = jax.random.split(key, 4)
    lim1 = 1.0 / jnp.sqrt(dim)
    lim2 = 1.0 / jnp.sqrt(hidden_size)
    w1 = jax.random.uniform(k1, (dim, hidden_size), dtype, -lim1, lim1)
    b1 = jax.random.uniform(k2, (1, hidden_size), dtype, -lim1, lim1)
    w2 = jax.random.uniform(k3, (hidden_size, projection_size), dtype, -lim2, lim2)
    b2 = jax.random.uniform(k4, (1, projection_size), dtype, -lim2, lim2)
    return w1, b1, w2, b2


def mlp_reference(x, w1, b1, w2, b2):
    h = jnp.maximum(x @ w1 + b1, 0.0)
    return h @ w2 + b2


if __name__ == "__main__":
    key = jax.random.PRNGKey(0)
    kx1, kx2, kp = jax.random.split(key, 3)

    dim, hidden, proj = 32, 256, 64
    w1, b1, w2, b2 = init_mlp_params(kp, dim, proj, hidden)

    # bf16 matmul operands with f32 accumulation -> bf16-appropriate tolerance vs f32 ref.
    tol = dict(atol=5e-2, rtol=5e-2)

    # Case 1: small batch, single batch tile, single hidden chunk.
    x1 = jax.random.normal(kx1, (8, dim), jnp.float32)
    out1 = jax.block_until_ready(mlp_pallas(x1, w1, b1, w2, b2))
    ref1 = mlp_reference(x1, w1, b1, w2, b2)
    assert out1.shape == (8, proj)
    assert jnp.allclose(out1, ref1, **tol), (
        f"mismatch (small), max abs err {float(jnp.max(jnp.abs(out1 - ref1)))}")

    # Case 2: ragged batch grid (48 rows, tile_b=32 -> partial last tile) plus the
    # hidden-axis accumulator path (tile_h=128 -> 2 reduction steps through scratch).
    x2 = jax.random.normal(kx2, (48, dim), jnp.float32)
    out2 = jax.block_until_ready(
        mlp_pallas(x2, w1, b1, w2, b2, tile_b=32, tile_h=128))
    ref2 = mlp_reference(x2, w1, b1, w2, b2)
    assert out2.shape == (48, proj)
    assert jnp.allclose(out2, ref2, **tol), (
        f"mismatch (tiled), max abs err {float(jnp.max(jnp.abs(out2 - ref2)))}")

    print("KERNEL_OK")
</pallas_src>

<mosaic_0001>
module attributes {stable_mosaic.version = 11 : i64} {
  func.func @_mlp_kernel(%arg0: i32, %arg1: i32, %arg2: i32, %arg3: memref<8x32xf32, #tpu.memory_space<vmem>>, %arg4: memref<32x256xbf16, #tpu.memory_space<vmem>>, %arg5: memref<1x256xf32, #tpu.memory_space<vmem>>, %arg6: memref<256x128xbf16, #tpu.memory_space<vmem>>, %arg7: memref<1x128xf32, #tpu.memory_space<vmem>>, %arg8: memref<8x128xf32, #tpu.memory_space<vmem>>, %arg9: memref<8x128xf32, #tpu.memory_space<vmem>>) attributes {dimension_semantics = [#tpu.dimension_semantics<parallel>, #tpu.dimension_semantics<parallel>, #tpu.dimension_semantics<arbitrary>], iteration_bounds = array<i64: 1, 1, 1>, scalar_prefetch = 0 : i64, scratch_operands = 1 : i64, tpu.core_type = #tpu.core_type<tc>, window_params = [{transform_indices = @transform_0, window_bounds = array<i64: 8, 32>}, {transform_indices = @transform_1, window_bounds = array<i64: 32, 256>}, {transform_indices = @transform_2, window_bounds = array<i64: 1, 256>}, {transform_indices = @transform_3, window_bounds = array<i64: 256, 128>}, {transform_indices = @transform_4, window_bounds = array<i64: 1, 128>}, {transform_indices = @transform_5, window_bounds = array<i64: 8, 128>}]} {
    %c0_i32 = arith.constant 0 : i32
    %0 = arith.cmpi eq, %arg2, %c0_i32 : i32
    %1 = arith.extui %0 : i1 to i32
    %c0_i32_0 = arith.constant 0 : i32
    %2 = arith.cmpi ne, %1, %c0_i32_0 : i32
    scf.if %2 {
      %cst_16 = arith.constant 0.000000e+00 : f32
      %21 = vector.broadcast %cst_16 : f32 to vector<8x128xf32>
      %c0_17 = arith.constant 0 : index
      %c0_18 = arith.constant 0 : index
      %22 = vector.load %arg9[%c0_17, %c0_18] : memref<8x128xf32, #tpu.memory_space<vmem>>, vector<8x128xf32>
      tpu.vector_store %arg9[%c0_17, %c0_18], %21 {strides = array<i32>} : memref<8x128xf32, #tpu.memory_space<vmem>>, vector<8x128xf32>,
    } else {
    }
    %c0 = arith.constant 0 : index
    %c0_1 = arith.constant 0 : index
    %3 = vector.load %arg3[%c0, %c0_1] : memref<8x32xf32, #tpu.memory_space<vmem>>, vector<8x32xf32>
    %4 = arith.truncf %3 : vector<8x32xf32> to vector<8x32xbf16>
    %c0_2 = arith.constant 0 : index
    %c0_3 = arith.constant 0 : index
    %5 = vector.load %arg4[%c0_2, %c0_3] : memref<32x256xbf16, #tpu.memory_space<vmem>>, vector<32x256xbf16>
    %cst = arith.constant dense<0.000000e+00> : vector<8x256xf32>
    %6 = tpu.matmul %4, %5, %cst {dimension_numbers = #tpu.dot_dimension_numbers<[1], [0], [0], [1], [0, 0, 1, 1], [], []>} : vector<8x32xbf16>, vector<32x256xbf16>, vector<8x256xf32> -> vector<8x256xf32>
    %c0_4 = arith.constant 0 : index
    %c0_5 = arith.constant 0 : index
    %7 = vector.load %arg5[%c0_4, %c0_5] : memref<1x256xf32, #tpu.memory_space<vmem>>, vector<1x256xf32>
    %8 = vector.broadcast %7 : vector<1x256xf32> to vector<8x256xf32>
    %9 = arith.addf %6, %8 : vector<8x256xf32>
    %cst_6 = arith.constant 0.000000e+00 : f32
    %10 = vector.broadcast %cst_6 : f32 to vector<8x256xf32>
    %11 = arith.maximumf %9, %10 : vector<8x256xf32>
    %c0_7 = arith.constant 0 : index
    %c0_8 = arith.constant 0 : index
    %12 = vector.load %arg9[%c0_7, %c0_8] : memref<8x128xf32, #tpu.memory_space<vmem>>, vector<8x128xf32>
    %13 = arith.truncf %11 : vector<8x256xf32> to vector<8x256xbf16>
    %c0_9 = arith.constant 0 : index
    %c0_10 = arith.constant 0 : index
    %14 = vector.load %arg6[%c0_9, %c0_10] : memref<256x128xbf16, #tpu.memory_space<vmem>>, vector<256x128xbf16>
    %cst_11 = arith.constant dense<0.000000e+00> : vector<8x128xf32>
    %15 = tpu.matmul %13, %14, %cst_11 {dimension_numbers = #tpu.dot_dimension_numbers<[1], [0], [0], [1], [0, 0, 1, 1], [], []>} : vector<8x256xbf16>, vector<256x128xbf16>, vector<8x128xf32> -> vector<8x128xf32>
    %16 = arith.addf %12, %15 : vector<8x128xf32>
    %c0_12 = arith.constant 0 : index
    %c0_13 = arith.constant 0 : index
    %17 = vector.load %arg9[%c0_12, %c0_13] : memref<8x128xf32, #tpu.memory_space<vmem>>, vector<8x128xf32>
    tpu.vector_store %arg9[%c0_12, %c0_13], %16 {strides = array<i32>} : memref<8x128xf32, #tpu.memory_space<vmem>>, vector<8x128xf32>,
    %c0_i32_14 = arith.constant 0 : i32
    %18 = arith.cmpi eq, %arg2, %c0_i32_14 : i32
    %19 = arith.extui %18 : i1 to i32
    %c0_i32_15 = arith.constant 0 : i32
    %20 = arith.cmpi ne, %19, %c0_i32_15 : i32
    scf.if %20 {
      %c0_16 = arith.constant 0 : index
      %c0_17 = arith.constant 0 : index
      %21 = vector.load %arg9[%c0_16, %c0_17] : memref<8x128xf32, #tpu.memory_space<vmem>>, vector<8x128xf32>
      %c0_18 = arith.constant 0 : index
      %c0_19 = arith.constant 0 : index
      %22 = vector.load %arg7[%c0_18, %c0_19] : memref<1x128xf32, #tpu.memory_space<vmem>>, vector<1x128xf32>
      %23 = vector.broadcast %22 : vector<1x128xf32> to vector<8x128xf32>
      %24 = arith.addf %21, %23 : vector<8x128xf32>
      %c0_20 = arith.constant 0 : index
      %c0_21 = arith.constant 0 : index
      %25 = vector.load %arg8[%c0_20, %c0_21] : memref<8x128xf32, #tpu.memory_space<vmem>>, vector<8x128xf32>
      tpu.vector_store %arg8[%c0_20, %c0_21], %24 {strides = array<i32>} : memref<8x128xf32, #tpu.memory_space<vmem>>, vector<8x128xf32>,
    } else {
    }
    return
  }
  func.func @transform_0(%arg0: i32, %arg1: i32, %arg2: i32) -> (i32, i32) {
    %c0_i32 = arith.constant 0 : i32
    %c0_i32_0 = arith.constant 0 : i32
    return %arg0, %c0_i32 : i32, i32
  }
  func.func @transform_1(%arg0: i32, %arg1: i32, %arg2: i32) -> (i32, i32) {
    %c0_i32 = arith.constant 0 : i32
    %c0_i32_0 = arith.constant 0 : i32
    return %c0_i32, %arg2 : i32, i32
  }
  func.func @transform_2(%arg0: i32, %arg1: i32, %arg2: i32) -> (i32, i32) {
    %c0_i32 = arith.constant 0 : i32
    %c0_i32_0 = arith.constant 0 : i32
    return %c0_i32, %arg2 : i32, i32
  }
  func.func @transform_3(%arg0: i32, %arg1: i32, %arg2: i32) -> (i32, i32) {
    %c0_i32 = arith.constant 0 : i32
    return %arg2, %arg1 : i32, i32
  }
  func.func @transform_4(%arg0: i32, %arg1: i32, %arg2: i32) -> (i32, i32) {
    %c0_i32 = arith.constant 0 : i32
    %c0_i32_0 = arith.constant 0 : i32
    return %c0_i32, %arg1 : i32, i32
  }
  func.func @transform_5(%arg0: i32, %arg1: i32, %arg2: i32) -> (i32, i32) {
    %c0_i32 = arith.constant 0 : i32
    return %arg0, %arg1 : i32, i32
  }
}

</mosaic_0001>

<llo_original>
// kernel: tpu_custom_call.1
$region0: #{tpu_custom_call.1}
  #allocation0 [shape = 'u32[]', space=smem, size = 0x4, offset = 0x4, fixed_abs, tag = 'smem constant byte address 0x4 - core index']
  #allocation1 [shape = 'u32[144,128]{1,0:T(1,128)}', space=vmem, size = 0x12000, scoped, tag = 'internal scratch']
  #allocation2 [shape = 'f32[8,128]{1,0:T(8,128)}', space=vmem, size = 0x1000, scoped, tag = 'scratch operand']
  %s0 = inlined_call_operand.hbm [shape: f32[8,32], index: 0, kind: input, shape index: {}]
  %s1 = inlined_call_operand.hbm [shape: bf16[32,256], index: 1, kind: input, shape index: {}]
  %s2 = inlined_call_operand.vmem [shape: f32[1,256], index: 2, kind: input, shape index: {}]
  %s3 = inlined_call_operand.hbm [shape: bf16[256,128], index: 3, kind: input, shape index: {}]
  %s4 = inlined_call_operand.vmem [shape: f32[1,128], index: 4, kind: input, shape index: {}]
  %s5 = inlined_call_operand.hbm [shape: f32[8,128], index: 5, kind: output, shape index: {}]
  %s6 = sld [smem:[#allocation0]]
  $region50: #{tpu_custom_call.1} parent=0
    _
  %s8 = ssub.s32 1, %s6
  %s9 = scalar_select 0, %s8, %s6
  $region1: #{tpu_custom_call.1} parent=0
    #allocation3 [shape = 'u8[4096]{0}', space=vmem, size = 0x1000, scoped, tag = 'input window, operand 0, single buffered']
    #allocation4 [shape = 's32[1]{0}', space=sflag, size = 0x4, scoped, tag = 'scoped memory for tpu_custom_call.1']
    #allocation5 [shape = 's32[1]{0}', space=sflag, size = 0x4, scoped, tag = 'scoped memory for tpu_custom_call.1']
    #allocation6 [shape = 'u8[16384]{0}', space=vmem, size = 0x4000, scoped, tag = 'input window, operand 1, single buffered']
    #allocation7 [shape = 's32[1]{0}', space=sflag, size = 0x4, scoped, tag = 'scoped memory for tpu_custom_call.1']
    #allocation8 [shape = 'u8[65536]{0}', space=vmem, size = 0x10000, scoped, tag = 'input window, operand 3, single buffered']
    #allocation9 [shape = 'u8[4096]{0}', space=vmem, size = 0x1000, scoped, tag = 'output window, operand 0, single buffered']
    %10 = vsyncpa [#allocation4], 0
    %11 = vsyncpa [#allocation7], 0
    %12 = vsyncpa [#allocation5], 0
    // Predicated region
    $region2: #{tpu_custom_call.1} parent=1 // pred_check
      _
    $region3: #{tpu_custom_call.1} parent=1 // pred_check_branch
      %14 = sbr.rel (0) target = $region5
    $region4: #{tpu_custom_call.1} parent=1 // pred_region
      %s16 = ssub.s32 128, 128
      %17 = vsyncadd [#allocation4], %s16
      %s19 = sshll.u32 [#allocation3], 4
      %s20 = int_to_ptr.vmem [resolvable:$true] %s19
      %22 = dma.hbm_to_vmem [thread:$0]  %s0, 128, %s20, [#allocation4]
    $region5: #{tpu_custom_call.1} parent=1 // pred_fallthru
      _
    // Predicated region
    $region6: #{tpu_custom_call.1} parent=1 // pred_check
      _
    $region7: #{tpu_custom_call.1} parent=1 // pred_check_branch
      %24 = sbr.rel (0) target = $region9
    $region8: #{tpu_custom_call.1} parent=1 // pred_region
      %s26 = ssub.s32 512, 512
      %27 = vsyncadd [#allocation7], %s26
      %s28 = sshll.u32 [#allocation6], 4
      %s29 = int_to_ptr.vmem [resolvable:$true] %s28
      %34 = dma.hbm_to_vmem [thread:$0]  %s1, 512, %s29, [#allocation7], 128, 128, 8
    $region9: #{tpu_custom_call.1} parent=1 // pred_fallthru
      _
    // Predicated region
    $region10: #{tpu_custom_call.1} parent=1 // pred_check
      _
    $region11: #{tpu_custom_call.1} parent=1 // pred_check_branch
      %36 = sbr.rel (0) target = $region13
    $region12: #{tpu_custom_call.1} parent=1 // pred_region
      _
    $region13: #{tpu_custom_call.1} parent=1 // pred_fallthru
      _
    // Predicated region
    $region14: #{tpu_custom_call.1} parent=1 // pred_check
      _
    $region15: #{tpu_custom_call.1} parent=1 // pred_check_branch
      %38 = sbr.rel (0) target = $region17
    $region16: #{tpu_custom_call.1} parent=1 // pred_region
      %s40 = ssub.s32 2048, 2048
      %41 = vsyncadd [#allocation7], %s40
      %s42 = sshll.u32 [#allocation8], 4
      %s43 = int_to_ptr.vmem [resolvable:$true] %s42
      %48 = dma.hbm_to_vmem [thread:$0]  %s3, 2048, %s43, [#allocation7], 64, 64, 4
    $region17: #{tpu_custom_call.1} parent=1 // pred_fallthru
      _
    // Predicated region
    $region18: #{tpu_custom_call.1} parent=1 // pred_check
      _
    $region19: #{tpu_custom_call.1} parent=1 // pred_check_branch
      %50 = sbr.rel (0) target = $region21
    $region20: #{tpu_custom_call.1} parent=1 // pred_region
      _
    $region21: #{tpu_custom_call.1} parent=1 // pred_fallthru
      _
    // Predicated region
    $region22: #{tpu_custom_call.1} parent=1 // pred_check
      _
    $region23: #{tpu_custom_call.1} parent=1 // pred_check_branch
      %52 = sbr.rel (0) target = $region25
    $region24: #{tpu_custom_call.1} parent=1 // pred_region
      %53 = dma.done [#allocation4], 128
    $region25: #{tpu_custom_call.1} parent=1 // pred_fallthru
      _
    // Predicated region
    $region26: #{tpu_custom_call.1} parent=1 // pred_check
      _
    $region27: #{tpu_custom_call.1} parent=1 // pred_check_branch
      %55 = sbr.rel (0) target = $region29
    $region28: #{tpu_custom_call.1} parent=1 // pred_region
      %56 = dma.done [#allocation7], 512
    $region29: #{tpu_custom_call.1} parent=1 // pred_fallthru
      _
    // Predicated region
    $region30: #{tpu_custom_call.1} parent=1 // pred_check
      _
    $region31: #{tpu_custom_call.1} parent=1 // pred_check_branch
      %58 = sbr.rel (0) target = $region33
    $region32: #{tpu_custom_call.1} parent=1 // pred_region
      %59 = dma.done [#allocation7], 2048
    $region33: #{tpu_custom_call.1} parent=1 // pred_fallthru
      _
    %p61 = scmp.eq.s32.totalorder 0, 0
    // Predicated region
    $region34: #{tpu_custom_call.1} parent=1 // pred_check
      %p62 = pneg %p61
    $region35: #{tpu_custom_call.1} parent=1 // pred_check_branch
      %64 = sbr.rel (%p62) target = $region37
    $region36: #{tpu_custom_call.1} parent=1 // pred_region
      %65 = vst [vmem:[#allocation2] sm:$0xff] 0.0
    $region37: #{tpu_custom_call.1} parent=1 // pred_fallthru
      _
    %v66 = vld [vmem:[#allocation3] sm:$0xff]
    %v67 = vpack.c.bf16 %v66, %v66
    %v68 = vld [vmem:[#allocation6] sm:$0xff]
    %v69 = vld [vmem:[#allocation6 + $0x8] sm:$0xff]
    %v70 = vld [vmem:[#allocation6 + $0x10] sm:$0xff]
    %v71 = vld [vmem:[#allocation6 + $0x18] sm:$0xff]
    %v72 = vld [vmem:[%s2] sm:$0x3]
    %v74 = vlaneseq
    %v75 = vshrl.u32 %v74, 7
    %v76 = vsub.s32 0, %v75
    %v77 = vrot.slane %v72, %v76
    %v78 = vlaneseq
    %v79 = vshrl.u32 %v78, 7
    %v80 = vsub.s32 1, %v79
    %v81 = vrot.slane %v72, %v80
    %v88 = vunpack.c.l.b16 %v68
    %v89 = vunpack.c.h.b16 %v68
    %v90 = vunpack.c.l.b16 %v69
    %v91 = vunpack.c.h.b16 %v69
    %v92 = vunpack.c.l.b16 %v70
    %v93 = vunpack.c.h.b16 %v70
    %v94 = vunpack.c.l.b16 %v71
    %v95 = vunpack.c.h.b16 %v71
    %v96 = vpack.c.b16 %v90, %v88
    %v97 = vpack.c.b16 %v91, %v89
    %v98 = vpack.c.b16 %v94, %v92
    %v99 = vpack.c.b16 %v95, %v93
    %vm104 = vcmask 261120
    %v106 = vsel %vm104, %v67, 0
    %108 = vmatprep.subr.bf16.mxu0 0
    %109 = vmatpush1.bf16.msra.mxu0 0
    %110 = vmatprep.subr.bf16.mxu0 0
    %111 = vmatpush1.bf16.msra.mxu0 0
    %112 = vmatprep.subr.bf16.mxu0 0
    %113 = vmatpush1.bf16.msra.mxu0 0
    %114 = vmatprep.subr.bf16.mxu0 0
    %115 = vmatpush1.bf16.msra.mxu0 0
    %116 = vmatprep.subr.bf16.mxu0 0
    %117 = vmatpush1.bf16.msra.mxu0 0
    %118 = vmatprep.subr.bf16.mxu0 0
    %119 = vmatpush1.bf16.msra.mxu0 0
    %120 = vmatprep.subr.bf16.mxu0 %v99
    %121 = vmatpush1.bf16.msra.mxu0 %v98
    %122 = vmatprep.subr.bf16.mxu0 %v97
    %123 = vmatpush1.bf16.msra.mxu0 %v96
    %124 = vmatprep.subr.bf16.mxu0 0
    %125 = vmatpush2.bf16.msra.mxu0 0
    %126 = vmatprep.subr.bf16.mxu0 0
    %127 = vmatpush2.bf16.msra.mxu0 0
    %128 = vmatprep.subr.bf16.mxu0 0
    %129 = vmatpush2.bf16.msra.mxu0 0
    %130 = vmatprep.subr.bf16.mxu0 0
    %131 = vmatpush2.bf16.msra.mxu0 0
    %132 = vmatprep.subr.bf16.mxu0 0
    %133 = vmatpush2.bf16.msra.mxu0 0
    %134 = vmatprep.subr.bf16.mxu0 0
    %135 = vmatpush2.bf16.msra.mxu0 0
    %136 = vmatprep.subr.bf16.mxu0 0
    %137 = vmatpush2.bf16.msra.mxu0 0
    %138 = vmatprep.subr.bf16.mxu0 0
    %139 = vmatpush2.bf16.msra.mxu0 0
    %140 = vmatprep.mubr.bf16.mxu0 0
    %141 = vmatmul.mubr.bf16.gmra.mxu0 %v106
    %v142 = vpop.f32.mrf.mxu0
    %v143 = vadd.f32 %v77, %v142
    %v144 = vpop.f32.mrf.mxu0
    %v145 = vadd.f32 %v81, %v144
    %v146 = vpop.f32.mrf.mxu0
    %v147 = vpop.f32.mrf.mxu0
    %148 = vdwg.mxu0
    %v149 = vmax.f32 %v143, 0.0
    %v150 = vmax.f32 %v145, 0.0
    %v151 = vld [vmem:[#allocation2] sm:$0xff]
    %v152 = vpack.c.bf16 %v149, %v149
    %v153 = vpack.c.bf16 %v150, %v150
    %v154 = vld [vmem:[#allocation8] sm:$0xf]
    %v155 = vld [vmem:[#allocation8 + $0x4] sm:$0xf]
    %v156 = vld [vmem:[#allocation8 + $0x8] sm:$0xf]
    %v157 = vld [vmem:[#allocation8 + $0xc] sm:$0xf]
    %v158 = vld [vmem:[#allocation8 + $0x10] sm:$0xf]
    %v159 = vld [vmem:[#allocation8 + $0x14] sm:$0xf]
    %v160 = vld [vmem:[#allocation8 + $0x18] sm:$0xf]
    %v161 = vld [vmem:[#allocation8 + $0x1c] sm:$0xf]
    %v162 = vld [vmem:[#allocation8 + $0x20] sm:$0xf]
    %v163 = vld [vmem:[#allocation8 + $0x24] sm:$0xf]
    %v164 = vld [vmem:[#allocation8 + $0x28] sm:$0xf]
    %v165 = vld [vmem:[#allocation8 + $0x2c] sm:$0xf]
    %v166 = vld [vmem:[#allocation8 + $0x30] sm:$0xf]
    %v167 = vld [vmem:[#allocation8 + $0x34] sm:$0xf]
    %v168 = vld [vmem:[#allocation8 + $0x38] sm:$0xf]
    %v169 = vld [vmem:[#allocation8 + $0x3c] sm:$0xf]
    %v170 = vld [vmem:[#allocation8 + $0x40] sm:$0xf]
    %v171 = vld [vmem:[#allocation8 + $0x44] sm:$0xf]
    %v172 = vld [vmem:[#allocation8 + $0x48] sm:$0xf]
    %v173 = vld [vmem:[#allocation8 + $0x4c] sm:$0xf]
    %v174 = vld [vmem:[#allocation8 + $0x50] sm:$0xf]
    %v175 = vld [vmem:[#allocation8 + $0x54] sm:$0xf]
    %v176 = vld [vmem:[#allocation8 + $0x58] sm:$0xf]
    %v177 = vld [vmem:[#allocation8 + $0x5c] sm:$0xf]
    %v178 = vld [vmem:[#allocation8 + $0x60] sm:$0xf]
    %v179 = vld [vmem:[#allocation8 + $0x64] sm:$0xf]
    %v180 = vld [vmem:[#allocation8 + $0x68] sm:$0xf]
    %v181 = vld [vmem:[#allocation8 + $0x6c] sm:$0xf]
    %v182 = vld [vmem:[#allocation8 + $0x70] sm:$0xf]
    %v183 = vld [vmem:[#allocation8 + $0x74] sm:$0xf]
    %v184 = vld [vmem:[#allocation8 + $0x78] sm:$0xf]
    %v185 = vld [vmem:[#allocation8 + $0x7c] sm:$0xf]
    %v218 = vunpack.c.l.b16 %v154
    %v219 = vunpack.c.l.b16 %v155
    %v220 = vunpack.c.l.b16 %v156
    %v221 = vunpack.c.l.b16 %v157
    %v222 = vunpack.c.l.b16 %v158
    %v223 = vunpack.c.l.b16 %v159
    %v224 = vunpack.c.l.b16 %v160
    %v225 = vunpack.c.l.b16 %v161
    %v226 = vunpack.c.l.b16 %v162
    %v227 = vunpack.c.l.b16 %v163
    %v228 = vunpack.c.l.b16 %v164
    %v229 = vunpack.c.l.b16 %v165
    %v230 = vunpack.c.l.b16 %v166
    %v231 = vunpack.c.l.b16 %v167
    %v232 = vunpack.c.l.b16 %v168
    %v233 = vunpack.c.l.b16 %v169
    %v234 = vunpack.c.l.b16 %v170
    %v235 = vunpack.c.l.b16 %v171
    %v236 = vunpack.c.l.b16 %v172
    %v237 = vunpack.c.l.b16 %v173
    %v238 = vunpack.c.l.b16 %v174
    %v239 = vunpack.c.l.b16 %v175
    %v240 = vunpack.c.l.b16 %v176
    %v241 = vunpack.c.l.b16 %v177
    %v242 = vunpack.c.l.b16 %v178
    %v243 = vunpack.c.l.b16 %v179
    %v244 = vunpack.c.l.b16 %v180
    %v245 = vunpack.c.l.b16 %v181
    %v246 = vunpack.c.l.b16 %v182
    %v247 = vunpack.c.l.b16 %v183
    %v248 = vunpack.c.l.b16 %v184
    %v249 = vunpack.c.l.b16 %v185
    %v250 = vpack.c.b16 %v219, %v218
    %v251 = vpack.c.b16 %v221, %v220
    %v252 = vpack.c.b16 %v223, %v222
    %v253 = vpack.c.b16 %v225, %v224
    %v254 = vpack.c.b16 %v227, %v226
    %v255 = vpack.c.b16 %v229, %v228
    %v256 = vpack.c.b16 %v231, %v230
    %v257 = vpack.c.b16 %v233, %v232
    %v258 = vpack.c.b16 %v235, %v234
    %v259 = vpack.c.b16 %v237, %v236
    %v260 = vpack.c.b16 %v239, %v238
    %v261 = vpack.c.b16 %v241, %v240
    %v262 = vpack.c.b16 %v243, %v242
    %v263 = vpack.c.b16 %v245, %v244
    %v264 = vpack.c.b16 %v247, %v246
    %v265 = vpack.c.b16 %v249, %v248
    %282 = vmatprep.subr.bf16.mxu0 0
    %283 = vmatpush1.bf16.msra.mxu0 %v257
    %284 = vmatprep.subr.bf16.mxu0 0
    %285 = vmatpush1.bf16.msra.mxu0 %v256
    %286 = vmatprep.subr.bf16.mxu0 0
    %287 = vmatpush1.bf16.msra.mxu0 %v255
    %288 = vmatprep.subr.bf16.mxu0 0
    %289 = vmatpush1.bf16.msra.mxu0 %v254
    %290 = vmatprep.subr.bf16.mxu0 0
    %291 = vmatpush1.bf16.msra.mxu0 %v253
    %292 = vmatprep.subr.bf16.mxu0 0
    %293 = vmatpush1.bf16.msra.mxu0 %v252
    %294 = vmatprep.subr.bf16.mxu0 0
    %295 = vmatpush1.bf16.msra.mxu0 %v251
    %296 = vmatprep.subr.bf16.mxu0 0
    %297 = vmatpush1.bf16.msra.mxu0 %v250
    %298 = vmatprep.subr.bf16.mxu0 0
    %299 = vmatpush2.bf16.msra.mxu0 %v265
    %300 = vmatprep.subr.bf16.mxu0 0
    %301 = vmatpush2.bf16.msra.mxu0 %v264
    %302 = vmatprep.subr.bf16.mxu0 0
    %303 = vmatpush2.bf16.msra.mxu0 %v263
    %304 = vmatprep.subr.bf16.mxu0 0
    %305 = vmatpush2.bf16.msra.mxu0 %v262
    %306 = vmatprep.subr.bf16.mxu0 0
    %307 = vmatpush2.bf16.msra.mxu0 %v261
    %308 = vmatprep.subr.bf16.mxu0 0
    %309 = vmatpush2.bf16.msra.mxu0 %v260
    %310 = vmatprep.subr.bf16.mxu0 0
    %311 = vmatpush2.bf16.msra.mxu0 %v259
    %312 = vmatprep.subr.bf16.mxu0 0
    %313 = vmatpush2.bf16.msra.mxu0 %v258
    %314 = vmatprep.mubr.bf16.mxu0 %v153
    %315 = vmatmul.mubr.bf16.gmra.mxu0 %v152
    %v316 = vpop.f32.mrf.mxu0
    %v317 = vadd.f32 0.0, %v316
    %v318 = vpop.f32.mrf.mxu0
    %v319 = vpop.f32.mrf.mxu0
    %v320 = vpop.f32.mrf.mxu0
    %321 = vdwg.mxu0
    %v322 = vadd.f32 %v151, %v317
    %323 = vst [vmem:[#allocation2] sm:$0xff] %v322
    // Predicated region
    $region38: #{tpu_custom_call.1} parent=1 // pred_check
      %p324 = pneg %p61
    $region39: #{tpu_custom_call.1} parent=1 // pred_check_branch
      %326 = sbr.rel (%p324) target = $region41
    $region40: #{tpu_custom_call.1} parent=1 // pred_region
      %v327 = vld [vmem:[#allocation2] sm:$0xff]
      %v328 = vld [vmem:[%s4] sm:$0x1]
      %v330 = vlaneseq
      %v331 = vshrl.u32 %v330, 7
      %v332 = vsub.s32 0, %v331
      %v333 = vrot.slane %v328, %v332
      %v335 = vadd.f32 %v327, %v333
      %336 = vst [vmem:[#allocation9] sm:$0xff] %v335
    $region41: #{tpu_custom_call.1} parent=1 // pred_fallthru
      _
    // Predicated region
    $region42: #{tpu_custom_call.1} parent=1 // pred_check
      _
    $region43: #{tpu_custom_call.1} parent=1 // pred_check_branch
      %338 = sbr.rel (0) target = $region45
    $region44: #{tpu_custom_call.1} parent=1 // pred_region
      %s340 = ssub.s32 128, 128
      %341 = vsyncadd [#allocation5], %s340
      %s343 = sshll.u32 [#allocation9], 4
      %s344 = int_to_ptr.vmem [resolvable:$true] %s343
      %346 = dma.vmem_to_hbm [thread:$0]  %s344, 128, %s5, [#allocation5]
    $region45: #{tpu_custom_call.1} parent=1 // pred_fallthru
      _
    // Predicated region
    $region46: #{tpu_custom_call.1} parent=1 // pred_check
      _
    $region47: #{tpu_custom_call.1} parent=1 // pred_check_branch
      %348 = sbr.rel (0) target = $region49
    $region48: #{tpu_custom_call.1} parent=1 // pred_region
      %349 = dma.done [#allocation5], 128
    $region49: #{tpu_custom_call.1} parent=1 // pred_fallthru
      _
    %350 = vsyncpa [#allocation4], 1
    %351 = vsyncpa [#allocation7], 1
    %352 = vsyncpa [#allocation5], 1

</llo_original>
